<compile_context>
chip_gen: v7x
topology: tpu7x:2x2x1
jax: 0.10.0
libtpu: 0.0.40
codegen_flags: <defaults>
</compile_context>

<pallas_src>
import jax
import jax.numpy as jnp
from jax.experimental import pallas as pl
from jax.experimental.pallas import tpu as pltpu


def _round_up(v, m):
    return ((v + m - 1) // m) * m


def gnn_kernel(adj_ref, x_ref, w1_ref, w2_ref, wf_ref, b_ref, o_ref):
    # adj is a block-diagonal stack of (B/G) graphs, self-loops included,
    # zero-padded to [MP, MP] (MP a multiple of 128 -> lane-dense vregs).
    adj = adj_ref[...]                                   # [MP, MP]

    # Symmetric GCN normalization via a scaling vector (row-sum degree used on
    # both sides, exactly PyG gcn_norm).  Clamp only guards zero-degree padded
    # rows; real nodes have deg >= 1 thanks to self-loops.
    deg = jnp.sum(adj, axis=-1, keepdims=True)           # [MP, 1]
    inv_sqrt_d = jax.lax.rsqrt(jnp.maximum(deg, 1.0))    # [MP, 1]

    x = x_ref[...]                                       # [MP, F], F = 1
    b = b_ref[...]                                       # [3, HP] packed biases

    # ---- Layer 1: GCNConv(F=1 -> HP) + ReLU -------------------------------
    # Aggregate first (MP^2 * F MACs), then project: the K=1 projection is an
    # outer product done on the VPU as a broadcast multiply.
    agg = inv_sqrt_d * jnp.dot(adj, inv_sqrt_d * x,
                               preferred_element_type=jnp.float32)      # [MP, 1]
    h = jnp.maximum(agg * w1_ref[...] + b[0:1, :], 0.0)                 # [MP, HP]

    # ---- Layer 2: GCNConv(HP -> HP) + ReLU --------------------------------
    h = jnp.dot(h, w2_ref[...], preferred_element_type=jnp.float32)     # [MP, HP]
    h = inv_sqrt_d * jnp.dot(adj, inv_sqrt_d * h,
                             preferred_element_type=jnp.float32)
    h = jnp.maximum(h + b[1:2, :], 0.0)

    # ---- Final Linear(HP -> HP) -------------------------------------------
    # One lane-dense [MP, HP] slab stored per grid step.
    out = jnp.dot(h, wf_ref[...], preferred_element_type=jnp.float32) + b[2:3, :]
    o_ref[...] = out.astype(o_ref.dtype)


def correlation_gnn_pallas(adj, x, w1, b1, w2, b2, wf, bf, *, num_parallel_steps=2):
    """adj: [B, N, N] dense adjacency with self-loops; x: [B, N, F].

    num_parallel_steps: grid steps (default 2 so a v7x chip can use both
    TensorCores; costs v5e/v6e one extra ~0.35 us step, negligible).
    """
    B, N, _ = adj.shape
    F = x.shape[-1]
    H = wf.shape[1]

    G = num_parallel_steps if (num_parallel_steps >= 1 and B % num_parallel_steps == 0) else 1
    G = min(G, B)
    Bg = B // G                 # graphs packed per grid step
    Mg = Bg * N                 # real node rows per step
    MP = _round_up(Mg, 128)     # lane-dense adjacency / row padding
    HP = _round_up(H, 128)      # lane-dense hidden/output channels

    # Block-diagonal adjacency per group.  Off-diagonal blocks and padded
    # rows/columns are exactly zero, which is what keeps padded-row garbage
    # (ReLU of bias) from ever reaching real rows.
    adj_g = adj.reshape(G, Bg, N, N)
    eye = jnp.eye(Bg, dtype=adj.dtype)
    adj_bd = (eye[None, :, None, :, None] * adj_g[:, :, :, None, :]).reshape(G, Mg, Mg)
    adj_bd = jnp.pad(adj_bd, ((0, 0), (0, MP - Mg), (0, MP - Mg)))

    x_bd = jnp.pad(x.reshape(G, Mg, F), ((0, 0), (0, MP - Mg), (0, 0)))

    # Zero-padded weight columns / bias padding stay exactly zero through ReLU,
    # so slicing [:H] below is bit-identical to the unpadded math.
    w1_p = jnp.pad(w1, ((0, 0), (0, HP - H)))
    w2_p = jnp.pad(w2, ((0, HP - H), (0, HP - H)))
    wf_p = jnp.pad(wf, ((0, HP - H), (0, HP - H)))
    b_p = jnp.pad(jnp.concatenate([b1, b2, bf], axis=0), ((0, 0), (0, HP - H)))

    out = pl.pallas_call(
        gnn_kernel,
        out_shape=jax.ShapeDtypeStruct((G, MP, HP), jnp.float32),
        grid_spec=pltpu.PrefetchScalarGridSpec(
            num_scalar_prefetch=0,
            grid=(G,),
            in_specs=[
                pl.BlockSpec((None, MP, MP), lambda g: (g, 0, 0)),   # block-diag adjacency
                pl.BlockSpec((None, MP, F), lambda g: (g, 0, 0)),    # stacked features
                pl.BlockSpec((F, HP), lambda g: (0, 0)),             # w1 (VMEM-resident)
                pl.BlockSpec((HP, HP), lambda g: (0, 0)),            # w2 (VMEM-resident)
                pl.BlockSpec((HP, HP), lambda g: (0, 0)),            # wf (VMEM-resident)
                pl.BlockSpec((3, HP), lambda g: (0, 0)),             # packed biases
            ],
            out_specs=pl.BlockSpec((None, MP, HP), lambda g: (g, 0, 0)),
        ),
        compiler_params=pltpu.CompilerParams(
            dimension_semantics=("parallel",)),
    )(adj_bd, x_bd, w1_p, w2_p, wf_p, b_p)

    # Un-pack: drop padded rows/channels, split groups back into graphs.
    return out[:, :Mg, :H].reshape(B, N, H)


def correlation_gnn_reference(adj, x, w1, b1, w2, b2, wf, bf):
    """Plain-JAX reference, PyG GCNConv semantics (row-sum deg on both sides)."""
    deg = jnp.sum(adj, axis=-1, keepdims=True)
    inv_d = jax.lax.rsqrt(deg)

    def gcn(h, w, b):
        return inv_d * jnp.matmul(adj, inv_d * jnp.matmul(h, w)) + b

    h = jnp.maximum(gcn(x, w1, b1), 0.0)
    h = jnp.maximum(gcn(h, w2, b2), 0.0)
    return jnp.matmul(h, wf) + bf


def build_adjacency(key, batch, num_nodes, threshold=0.3):
    """Dense adjacency per window: edge iff return-series correlation >= thr.

    Equivalent to building edge_index and scattering it into a dense matrix.
    """
    # TODO(synk): the edge_index -> dense adjacency scatter has no clean Pallas
    # equivalent; it is done here in plain-JAX glue before the kernel call.
    returns = jax.random.normal(key, (batch, num_nodes, 32), dtype=jnp.float32)
    r = returns - returns.mean(axis=-1, keepdims=True)
    cov = jnp.matmul(r, jnp.swapaxes(r, -1, -2))
    d = jnp.sqrt(jnp.diagonal(cov, axis1=-2, axis2=-1))
    corr = cov / (d[..., :, None] * d[..., None, :])
    adj = (corr >= threshold).astype(jnp.float32)
    eye = jnp.eye(num_nodes, dtype=jnp.float32)
    adj = adj * (1.0 - eye) + eye          # drop diag, add self-loops
    return adj


if __name__ == "__main__":
    key = jax.random.PRNGKey(0)
    k_adj, k_x, k_w1, k_w2, k_wf, k_bf = jax.random.split(key, 6)

    B = 4    # batch of correlation graphs (time windows)
    N = 16   # tickers (nodes)
    F = 1    # num_features
    H = 16   # hidden_dim; num_layers = 2 (fused)

    adj = build_adjacency(k_adj, B, N)
    x = jax.random.normal(k_x, (B, N, F), dtype=jnp.float32)

    # Deterministic parameter init (glorot-ish GCN weights, zero GCN biases as
    # in PyG; small uniform for the final Linear).  Weights stored [in, out]
    # so the kernel computes y = x @ W + b.
    w1 = jax.random.normal(k_w1, (F, H), dtype=jnp.float32) * (1.0 / jnp.sqrt(F + H))
    b1 = jnp.zeros((1, H), dtype=jnp.float32)
    w2 = jax.random.normal(k_w2, (H, H), dtype=jnp.float32) * (1.0 / jnp.sqrt(H + H))
    b2 = jnp.zeros((1, H), dtype=jnp.float32)
    wf = jax.random.uniform(k_wf, (H, H), dtype=jnp.float32,
                            minval=-1.0 / jnp.sqrt(H), maxval=1.0 / jnp.sqrt(H))
    bf = jax.random.uniform(k_bf, (1, H), dtype=jnp.float32,
                            minval=-1.0 / jnp.sqrt(H), maxval=1.0 / jnp.sqrt(H))

    out = jax.jit(correlation_gnn_pallas)(adj, x, w1, b1, w2, b2, wf, bf)
    out = jax.block_until_ready(out)

    ref = correlation_gnn_reference(adj, x, w1, b1, w2, b2, wf, bf)
    assert out.shape == (B, N, H)
    assert jnp.allclose(out, ref, atol=1e-4, rtol=1e-4), "mismatch vs reference"

    print("KERNEL_OK")
</pallas_src>

<mosaic_0001>
module attributes {stable_mosaic.version = 11 : i64} {
  func.func @gnn_kernel(%arg0: i32, %arg1: memref<1x128x128xf32, #tpu.memory_space<vmem>>, %arg2: memref<1x128x1xf32, #tpu.memory_space<vmem>>, %arg3: memref<1x128xf32, #tpu.memory_space<vmem>>, %arg4: memref<128x128xf32, #tpu.memory_space<vmem>>, %arg5: memref<128x128xf32, #tpu.memory_space<vmem>>, %arg6: memref<3x128xf32, #tpu.memory_space<vmem>>, %arg7: memref<1x128x128xf32, #tpu.memory_space<vmem>>) attributes {dimension_semantics = [#tpu.dimension_semantics<parallel>], iteration_bounds = array<i64: 2>, scalar_prefetch = 0 : i64, scratch_operands = 0 : i64, tpu.core_type = #tpu.core_type<tc>, window_params = [{transform_indices = @transform_0, window_bounds = array<i64: 1, 128, 128>}, {transform_indices = @transform_1, window_bounds = array<i64: 1, 128, 1>}, {pipeline_mode = #tpu.pipeline_mode<synchronous>, transform_indices = @transform_2, window_bounds = array<i64: 1, 128>}, {pipeline_mode = #tpu.pipeline_mode<synchronous>, transform_indices = @transform_3, window_bounds = array<i64: 128, 128>}, {pipeline_mode = #tpu.pipeline_mode<synchronous>, transform_indices = @transform_4, window_bounds = array<i64: 128, 128>}, {pipeline_mode = #tpu.pipeline_mode<synchronous>, transform_indices = @transform_5, window_bounds = array<i64: 3, 128>}, {transform_indices = @transform_6, window_bounds = array<i64: 1, 128, 128>}]} {
    %c0 = arith.constant 0 : index
    %c0_0 = arith.constant 0 : index
    %c0_1 = arith.constant 0 : index
    %0 = vector.load %arg1[%c0, %c0_0, %c0_1] : memref<1x128x128xf32, #tpu.memory_space<vmem>>, vector<1x128x128xf32>
    %1 = vector.shape_cast %0 : vector<1x128x128xf32> to vector<128x128xf32>
    %cst = arith.constant dense<0.000000e+00> : vector<128xf32>
    %2 = vector.multi_reduction <add>, %1, %cst [1] : vector<128x128xf32> to vector<128xf32>
    %3 = vector.shape_cast %2 : vector<128xf32> to vector<128x1xf32>
    %cst_2 = arith.constant 1.000000e+00 : f32
    %4 = vector.broadcast %cst_2 : f32 to vector<128x1xf32>
    %5 = arith.maximumf %3, %4 : vector<128x1xf32>
    %6 = math.rsqrt %5 : vector<128x1xf32>
    %c0_3 = arith.constant 0 : index
    %c0_4 = arith.constant 0 : index
    %c0_5 = arith.constant 0 : index
    %7 = vector.load %arg2[%c0_3, %c0_4, %c0_5] : memref<1x128x1xf32, #tpu.memory_space<vmem>>, vector<1x128x1xf32>
    %8 = vector.shape_cast %7 : vector<1x128x1xf32> to vector<128x1xf32>
    %c0_6 = arith.constant 0 : index
    %c0_7 = arith.constant 0 : index
    %9 = vector.load %arg6[%c0_6, %c0_7] : memref<3x128xf32, #tpu.memory_space<vmem>>, vector<3x128xf32>
    %10 = arith.mulf %6, %8 : vector<128x1xf32>
    %cst_8 = arith.constant dense<0.000000e+00> : vector<128x1xf32>
    %11 = tpu.matmul %1, %10, %cst_8 {dimension_numbers = #tpu.dot_dimension_numbers<[1], [0], [0], [1], [0, 0, 1, 1], [], []>} : vector<128x128xf32>, vector<128x1xf32>, vector<128x1xf32> -> vector<128x1xf32>
    %12 = arith.mulf %6, %11 : vector<128x1xf32>
    %c0_9 = arith.constant 0 : index
    %c0_10 = arith.constant 0 : index
    %13 = vector.load %arg3[%c0_9, %c0_10] : memref<1x128xf32, #tpu.memory_space<vmem>>, vector<1x128xf32>
    %14 = vector.broadcast %12 : vector<128x1xf32> to vector<128x128xf32>
    %15 = vector.broadcast %13 : vector<1x128xf32> to vector<128x128xf32>
    %16 = arith.mulf %14, %15 : vector<128x128xf32>
    %17 = vector.extract_strided_slice %9 {offsets = [0, 0], sizes = [1, 128], strides = [1, 1]} : vector<3x128xf32> to vector<1x128xf32>
    %18 = vector.broadcast %17 : vector<1x128xf32> to vector<128x128xf32>
    %19 = arith.addf %16, %18 : vector<128x128xf32>
    %cst_11 = arith.constant 0.000000e+00 : f32
    %20 = vector.broadcast %cst_11 : f32 to vector<128x128xf32>
    %21 = arith.maximumf %19, %20 : vector<128x128xf32>
    %c0_12 = arith.constant 0 : index
    %c0_13 = arith.constant 0 : index
    %22 = vector.load %arg4[%c0_12, %c0_13] : memref<128x128xf32, #tpu.memory_space<vmem>>, vector<128x128xf32>
    %cst_14 = arith.constant dense<0.000000e+00> : vector<128x128xf32>
    %23 = tpu.matmul %21, %22, %cst_14 {dimension_numbers = #tpu.dot_dimension_numbers<[1], [0], [0], [1], [0, 0, 1, 1], [], []>} : vector<128x128xf32>, vector<128x128xf32>, vector<128x128xf32> -> vector<128x128xf32>
    %24 = vector.broadcast %6 : vector<128x1xf32> to vector<128x128xf32>
    %25 = arith.mulf %24, %23 : vector<128x128xf32>
    %cst_15 = arith.constant dense<0.000000e+00> : vector<128x128xf32>
    %26 = tpu.matmul %1, %25, %cst_15 {dimension_numbers = #tpu.dot_dimension_numbers<[1], [0], [0], [1], [0, 0, 1, 1], [], []>} : vector<128x128xf32>, vector<128x128xf32>, vector<128x128xf32> -> vector<128x128xf32>
    %27 = vector.broadcast %6 : vector<128x1xf32> to vector<128x128xf32>
    %28 = arith.mulf %27, %26 : vector<128x128xf32>
    %29 = vector.extract_strided_slice %9 {offsets = [1, 0], sizes = [1, 128], strides = [1, 1]} : vector<3x128xf32> to vector<1x128xf32>
    %30 = vector.broadcast %29 : vector<1x128xf32> to vector<128x128xf32>
    %31 = arith.addf %28, %30 : vector<128x128xf32>
    %cst_16 = arith.constant 0.000000e+00 : f32
    %32 = vector.broadcast %cst_16 : f32 to vector<128x128xf32>
    %33 = arith.maximumf %31, %32 : vector<128x128xf32>
    %c0_17 = arith.constant 0 : index
    %c0_18 = arith.constant 0 : index
    %34 = vector.load %arg5[%c0_17, %c0_18] : memref<128x128xf32, #tpu.memory_space<vmem>>, vector<128x128xf32>
    %cst_19 = arith.constant dense<0.000000e+00> : vector<128x128xf32>
    %35 = tpu.matmul %33, %34, %cst_19 {dimension_numbers = #tpu.dot_dimension_numbers<[1], [0], [0], [1], [0, 0, 1, 1], [], []>} : vector<128x128xf32>, vector<128x128xf32>, vector<128x128xf32> -> vector<128x128xf32>
    %36 = vector.extract_strided_slice %9 {offsets = [2, 0], sizes = [1, 128], strides = [1, 1]} : vector<3x128xf32> to vector<1x128xf32>
    %37 = vector.broadcast %36 : vector<1x128xf32> to vector<128x128xf32>
    %38 = arith.addf %35, %37 : vector<128x128xf32>
    %c0_20 = arith.constant 0 : index
    %c0_21 = arith.constant 0 : index
    %c0_22 = arith.constant 0 : index
    %39 = vector.load %arg7[%c0_20, %c0_21, %c0_22] : memref<1x128x128xf32, #tpu.memory_space<vmem>>, vector<1x128x128xf32>
    %40 = vector.shape_cast %39 : vector<1x128x128xf32> to vector<128x128xf32>
    %41 = vector.shape_cast %38 : vector<128x128xf32> to vector<1x128x128xf32>
    tpu.vector_store %arg7[%c0_20, %c0_21, %c0_22], %41 {strides = array<i32>} : memref<1x128x128xf32, #tpu.memory_space<vmem>>, vector<1x128x128xf32>,
    return
  }
  func.func @transform_0(%arg0: i32) -> (i32, i32, i32) {
    %c0_i32 = arith.constant 0 : i32
    %c0_i32_0 = arith.constant 0 : i32
    %c0_i32_1 = arith.constant 0 : i32
    return %arg0, %c0_i32, %c0_i32_0 : i32, i32, i32
  }
  func.func @transform_1(%arg0: i32) -> (i32, i32, i32) {
    %c0_i32 = arith.constant 0 : i32
    %c0_i32_0 = arith.constant 0 : i32
    %c0_i32_1 = arith.constant 0 : i32
    return %arg0, %c0_i32, %c0_i32_0 : i32, i32, i32
  }
  func.func @transform_2(%arg0: i32) -> (i32, i32) {
    %c0_i32 = arith.constant 0 : i32
    %c0_i32_0 = arith.constant 0 : i32
    %c0_i32_1 = arith.constant 0 : i32
    return %c0_i32, %c0_i32_0 : i32, i32
  }
  func.func @transform_3(%arg0: i32) -> (i32, i32) {
    %c0_i32 = arith.constant 0 : i32
    %c0_i32_0 = arith.constant 0 : i32
    %c0_i32_1 = arith.constant 0 : i32
    return %c0_i32, %c0_i32_0 : i32, i32
  }
  func.func @transform_4(%arg0: i32) -> (i32, i32) {
    %c0_i32 = arith.constant 0 : i32
    %c0_i32_0 = arith.constant 0 : i32
    %c0_i32_1 = arith.constant 0 : i32
    return %c0_i32, %c0_i32_0 : i32, i32
  }
  func.func @transform_5(%arg0: i32) -> (i32, i32) {
    %c0_i32 = arith.constant 0 : i32
    %c0_i32_0 = arith.constant 0 : i32
    %c0_i32_1 = arith.constant 0 : i32
    return %c0_i32, %c0_i32_0 : i32, i32
  }
  func.func @transform_6(%arg0: i32) -> (i32, i32, i32) {
    %c0_i32 = arith.constant 0 : i32
    %c0_i32_0 = arith.constant 0 : i32
    %c0_i32_1 = arith.constant 0 : i32
    return %arg0, %c0_i32, %c0_i32_0 : i32, i32, i32
  }
}

</mosaic_0001>

<llo_original>
// kernel: correlation_gnn_pallas.1
$region0: #{correlation_gnn_pallas.1}
  #allocation0 [shape = 'u32[]', space=smem, size = 0x4, offset = 0x4, fixed_abs, tag = 'smem constant byte address 0x4 - core index']
  #allocation1 [shape = 'u32[144,128]{1,0:T(1,128)}', space=vmem, size = 0x12000, scoped, tag = 'internal scratch']
  %s0 = inlined_call_operand.vmem [shape: f32[2,128,128], index: 0, kind: input, shape index: {}]
  %s1 = inlined_call_operand.vmem [shape: f32[2,128,1], index: 1, kind: input, shape index: {}]
  %s2 = inlined_call_operand.vmem [shape: f32[1,128], index: 2, kind: input, shape index: {}]
  %s3 = inlined_call_operand.vmem [shape: f32[128,128], index: 3, kind: input, shape index: {}]
  %s4 = inlined_call_operand.vmem [shape: f32[128,128], index: 4, kind: input, shape index: {}]
  %s5 = inlined_call_operand.vmem [shape: f32[3,128], index: 5, kind: input, shape index: {}]
  %s6 = inlined_call_operand.vmem [shape: f32[2,128,128], index: 6, kind: output, shape index: {}]
  %s7 = sld [smem:[#allocation0]]
  $region57: #{correlation_gnn_pallas.1} parent=0
    _
  %s9 = ssub.s32 1, %s7
  %s10 = scalar_select 0, %s9, %s7
  loop: start=0, step=1, limit=4
  $region2: #{correlation_gnn_pallas.1} parent=0 // loop_pre_header
    _
  $region3: #{correlation_gnn_pallas.1} parent=0 // loop_header
    %s12 = sphi 0, %s16
    %p13 = scmp.ge.s32.totalorder %s12, 4
    %s22 = sphi 0, %s24
    %s25 = sphi 0, %s22
    %s26 = sphi 0, %s25
    %s42 = sphi 0, %s26
    %s48 = sphi 0, %s50
    %s51 = sphi 0, %s48
    %s52 = sphi 0, %s51
    %s68 = sphi 0, %s52
    %s72 = sphi 0, %s72
    %s74 = sphi 0, %s72
    %s75 = sphi 0, %s74
    %s89 = sphi 0, %s75
    %s93 = sphi 0, %s93
    %s95 = sphi 0, %s93
    %s96 = sphi 0, %s95
    %s110 = sphi 0, %s96
    %s114 = sphi 0, %s114
    %s116 = sphi 0, %s114
    %s117 = sphi 0, %s116
    %s131 = sphi 0, %s117
    %s135 = sphi 0, %s135
    %s137 = sphi 0, %s135
    %s138 = sphi 0, %s137
    %s152 = sphi 0, %s138
    %s158 = sphi 0, %s160
    %s161 = sphi 0, %s158
    %s162 = sphi 0, %s161
    %s178 = sphi 0, %s162
  $region4: #{correlation_gnn_pallas.1} parent=0 // loop_header_branch
    %15 = sbr.rel (%p13) target = $region8
  $region5: #{correlation_gnn_pallas.1} parent=0 // loop_body
    %s17 = ssub.s32 %s12, 1
    %s18 = ssub.s32 %s12, 2
    %s19 = sadd.s32 %s12, 1
    %s20 = ssub.s32 %s12, %s19
    %p21 = scmp.eq.s32.totalorder %s20, 0
    %s23 = sadd.s32 %s22, 1
    %s24 = scalar_select %p21, %s22, %s23
    %p27 = pneg %p21
    %p28 = scmp.eq.s32.totalorder %s12, 1
    %p29 = por %p27, %p28
    %p30 = scmp.ne.s32.totalorder %s22, %s25
    %p31 = scmp.eq.s32.totalorder %s12, 0
    %p32 = por %p30, %p31
    %p33 = scmp.ne.s32.totalorder %s22, %s25
    %p34 = scmp.eq.s32.totalorder %s17, 1
    %p35 = por %p33, %p34
    %p36 = scmp.ne.s32.totalorder %s25, %s26
    %p37 = scmp.eq.s32.totalorder %s17, 0
    %p38 = por %p36, %p37
    %p39 = scmp.ne.s32.totalorder %s25, %s26
    %p40 = scmp.eq.s32.totalorder %s18, 1
    %p41 = por %p39, %p40
    %p43 = scmp.ne.s32.totalorder %s26, %s42
    %p44 = scmp.eq.s32.totalorder %s18, 0
    %p45 = por %p43, %p44
    %s46 = ssub.s32 %s12, %s19
    %p47 = scmp.eq.s32.totalorder %s46, 0
    %s49 = sadd.s32 %s48, 1
    %s50 = scalar_select %p47, %s48, %s49
    %p53 = pneg %p47
    %p54 = scmp.eq.s32.totalorder %s12, 1
    %p55 = por %p53, %p54
    %p56 = scmp.ne.s32.totalorder %s48, %s51
    %p57 = scmp.eq.s32.totalorder %s12, 0
    %p58 = por %p56, %p57
    %p59 = scmp.ne.s32.totalorder %s48, %s51
    %p60 = scmp.eq.s32.totalorder %s17, 1
    %p61 = por %p59, %p60
    %p62 = scmp.ne.s32.totalorder %s51, %s52
    %p63 = scmp.eq.s32.totalorder %s17, 0
    %p64 = por %p62, %p63
    %p65 = scmp.ne.s32.totalorder %s51, %s52
    %p66 = scmp.eq.s32.totalorder %s18, 1
    %p67 = por %p65, %p66
    %p69 = scmp.ne.s32.totalorder %s52, %s68
    %p70 = scmp.eq.s32.totalorder %s18, 0
    %p71 = por %p69, %p70
    %s73 = sadd.s32 %s72, 1
    %p76 = scmp.eq.s32.totalorder %s12, 1
    %p77 = scmp.ne.s32.totalorder %s72, %s74
    %p78 = scmp.eq.s32.totalorder %s12, 0
    %p79 = por %p77, %p78
    %p80 = scmp.ne.s32.totalorder %s72, %s74
    %p81 = scmp.eq.s32.totalorder %s17, 1
    %p82 = por %p80, %p81
    %p83 = scmp.ne.s32.totalorder %s74, %s75
    %p84 = scmp.eq.s32.totalorder %s17, 0
    %p85 = por %p83, %p84
    %p86 = scmp.ne.s32.totalorder %s74, %s75
    %p87 = scmp.eq.s32.totalorder %s18, 1
    %p88 = por %p86, %p87
    %p90 = scmp.ne.s32.totalorder %s75, %s89
    %p91 = scmp.eq.s32.totalorder %s18, 0
    %p92 = por %p90, %p91
    %s94 = sadd.s32 %s93, 1
    %p97 = scmp.eq.s32.totalorder %s12, 1
    %p98 = scmp.ne.s32.totalorder %s93, %s95
    %p99 = scmp.eq.s32.totalorder %s12, 0
    %p100 = por %p98, %p99
    %p101 = scmp.ne.s32.totalorder %s93, %s95
    %p102 = scmp.eq.s32.totalorder %s17, 1
    %p103 = por %p101, %p102
    %p104 = scmp.ne.s32.totalorder %s95, %s96
    %p105 = scmp.eq.s32.totalorder %s17, 0
    %p106 = por %p104, %p105
    %p107 = scmp.ne.s32.totalorder %s95, %s96
    %p108 = scmp.eq.s32.totalorder %s18, 1
    %p109 = por %p107, %p108
    %p111 = scmp.ne.s32.totalorder %s96, %s110
    %p112 = scmp.eq.s32.totalorder %s18, 0
    %p113 = por %p111, %p112
    %s115 = sadd.s32 %s114, 1
    %p118 = scmp.eq.s32.totalorder %s12, 1
    %p119 = scmp.ne.s32.totalorder %s114, %s116
    %p120 = scmp.eq.s32.totalorder %s12, 0
    %p121 = por %p119, %p120
    %p122 = scmp.ne.s32.totalorder %s114, %s116
    %p123 = scmp.eq.s32.totalorder %s17, 1
    %p124 = por %p122, %p123
    %p125 = scmp.ne.s32.totalorder %s116, %s117
    %p126 = scmp.eq.s32.totalorder %s17, 0
    %p127 = por %p125, %p126
    %p128 = scmp.ne.s32.totalorder %s116, %s117
    %p129 = scmp.eq.s32.totalorder %s18, 1
    %p130 = por %p128, %p129
    %p132 = scmp.ne.s32.totalorder %s117, %s131
    %p133 = scmp.eq.s32.totalorder %s18, 0
    %p134 = por %p132, %p133
    %s136 = sadd.s32 %s135, 1
    %p139 = scmp.eq.s32.totalorder %s12, 1
    %p140 = scmp.ne.s32.totalorder %s135, %s137
    %p141 = scmp.eq.s32.totalorder %s12, 0
    %p142 = por %p140, %p141
    %p143 = scmp.ne.s32.totalorder %s135, %s137
    %p144 = scmp.eq.s32.totalorder %s17, 1
    %p145 = por %p143, %p144
    %p146 = scmp.ne.s32.totalorder %s137, %s138
    %p147 = scmp.eq.s32.totalorder %s17, 0
    %p148 = por %p146, %p147
    %p149 = scmp.ne.s32.totalorder %s137, %s138
    %p150 = scmp.eq.s32.totalorder %s18, 1
    %p151 = por %p149, %p150
    %p153 = scmp.ne.s32.totalorder %s138, %s152
    %p154 = scmp.eq.s32.totalorder %s18, 0
    %p155 = por %p153, %p154
    %s156 = ssub.s32 %s12, %s19
    %p157 = scmp.eq.s32.totalorder %s156, 0
    %s159 = sadd.s32 %s158, 1
    %s160 = scalar_select %p157, %s158, %s159
    %p163 = pneg %p157
    %p164 = scmp.eq.s32.totalorder %s12, 1
    %p165 = por %p163, %p164
    %p166 = scmp.ne.s32.totalorder %s158, %s161
    %p167 = scmp.eq.s32.totalorder %s12, 0
    %p168 = por %p166, %p167
    %p169 = scmp.ne.s32.totalorder %s158, %s161
    %p170 = scmp.eq.s32.totalorder %s17, 1
    %p171 = por %p169, %p170
    %p172 = scmp.ne.s32.totalorder %s161, %s162
    %p173 = scmp.eq.s32.totalorder %s17, 0
    %p174 = por %p172, %p173
    %p175 = scmp.ne.s32.totalorder %s161, %s162
    %p176 = scmp.eq.s32.totalorder %s18, 1
    %p177 = por %p175, %p176
    %p179 = scmp.ne.s32.totalorder %s162, %s178
    %p180 = scmp.eq.s32.totalorder %s18, 0
    %p181 = por %p179, %p180
    %p182 = scmp.le.s32.totalorder 1, %s12
    %p183 = scmp.lt.s32.totalorder %s12, 3
    %p184 = pnand %p182, %p183
    %p185 = pneg %p184
    // Predicated region
    $region9: #{correlation_gnn_pallas.1} parent=5 // pred_check
      _
    $region10: #{correlation_gnn_pallas.1} parent=5 // pred_check_branch
      %187 = sbr.rel (%p184) target = $region12
    $region11: #{correlation_gnn_pallas.1} parent=5 // pred_region
      %s188 = ssub.s32 %s12, 1
      // Predicated region
      $region13: #{correlation_gnn_pallas.1} parent=11 // pred_check
        %p189 = pneg %p85
      $region14: #{correlation_gnn_pallas.1} parent=11 // pred_check_branch
        %191 = sbr.rel (%p189) target = $region16
      $region15: #{correlation_gnn_pallas.1} parent=11 // pred_region
        _
      $region16: #{correlation_gnn_pallas.1} parent=11 // pred_fallthru
        _
      // Predicated region
      $region17: #{correlation_gnn_pallas.1} parent=11 // pred_check
        %p192 = pneg %p106
      $region18: #{correlation_gnn_pallas.1} parent=11 // pred_check_branch
        %194 = sbr.rel (%p192) target = $region20
      $region19: #{correlation_gnn_pallas.1} parent=11 // pred_region
        _
      $region20: #{correlation_gnn_pallas.1} parent=11 // pred_fallthru
        _
      // Predicated region
      $region21: #{correlation_gnn_pallas.1} parent=11 // pred_check
        %p195 = pneg %p127
      $region22: #{correlation_gnn_pallas.1} parent=11 // pred_check_branch
        %197 = sbr.rel (%p195) target = $region24
      $region23: #{correlation_gnn_pallas.1} parent=11 // pred_region
        _
      $region24: #{correlation_gnn_pallas.1} parent=11 // pred_fallthru
        _
      // Predicated region
      $region25: #{correlation_gnn_pallas.1} parent=11 // pred_check
        %p198 = pneg %p148
      $region26: #{correlation_gnn_pallas.1} parent=11 // pred_check_branch
        %200 = sbr.rel (%p198) target = $region28
      $region27: #{correlation_gnn_pallas.1} parent=11 // pred_region
        _
      $region28: #{correlation_gnn_pallas.1} parent=11 // pred_fallthru
        _
    $region12: #{correlation_gnn_pallas.1} parent=5 // pred_fallthru
      _
    %p201 = scmp.lt.s32.totalorder %s12, 2
    // Predicated region
    $region29: #{correlation_gnn_pallas.1} parent=5 // pred_check
      %p202 = pneg %p201
    $region30: #{correlation_gnn_pallas.1} parent=5 // pred_check_branch
      %204 = sbr.rel (%p202) target = $region32
    $region31: #{correlation_gnn_pallas.1} parent=5 // pred_region
      // Predicated region
      $region33: #{correlation_gnn_pallas.1} parent=31 // pred_check
        %p205 = pneg %p32
      $region34: #{correlation_gnn_pallas.1} parent=31 // pred_check_branch
        %207 = sbr.rel (%p205) target = $region36
      $region35: #{correlation_gnn_pallas.1} parent=31 // pred_region
        %p208 = scmp.lt.s32.totalorder %s12, 1
        %s209 = scalar_select %p208, %s12, 1
        %s210 = smul.addr %s209, 16
        %s211 = smul.addr %s210, 8
        %s212 = scalar_lea.vmem %s0, %s211
      $region36: #{correlation_gnn_pallas.1} parent=31 // pred_fallthru
        _
      // Predicated region
      $region37: #{correlation_gnn_pallas.1} parent=31 // pred_check
        %p213 = pneg %p58
      $region38: #{correlation_gnn_pallas.1} parent=31 // pred_check_branch
        %215 = sbr.rel (%p213) target = $region40
      $region39: #{correlation_gnn_pallas.1} parent=31 // pred_region
        %p216 = scmp.lt.s32.totalorder %s12, 1
        %s217 = scalar_select %p216, %s12, 1
        %s218 = smul.addr %s217, 16
        %s219 = smul.addr %s218, 8
        %s220 = scalar_lea.vmem %s1, %s219
      $region40: #{correlation_gnn_pallas.1} parent=31 // pred_fallthru
        _
    $region32: #{correlation_gnn_pallas.1} parent=5 // pred_fallthru
      _
    %p221 = scmp.le.s32.totalorder 1, %s12
    %p222 = scmp.lt.s32.totalorder %s12, 3
    %p223 = pnand %p221, %p222
    %p224 = pneg %p223
    // Predicated region
    $region41: #{correlation_gnn_pallas.1} parent=5 // pred_check
      _
    $region42: #{correlation_gnn_pallas.1} parent=5 // pred_check_branch
      %226 = sbr.rel (%p223) target = $region44
    $region43: #{correlation_gnn_pallas.1} parent=5 // pred_region
      %s227 = ssub.s32 %s12, 1
      %p228 = scmp.lt.s32.totalorder %s17, 1
      %s229 = scalar_select %p228, %s17, 1
      %s230 = smul.addr %s229, 16
      %s231 = smul.addr %s230, 8
      %s232 = scalar_lea.vmem %s0, %s231
      %p233 = pneg %p38
      %p234 = pneg %p35
      %p235 = scmp.lt.s32.totalorder %s17, 1
      %s236 = scalar_select %p235, %s17, 1
      %s237 = smul.addr %s236, 16
      %s238 = smul.addr %s237, 8
      %s239 = scalar_lea.vmem %s1, %s238
      %p240 = pneg %p64
      %p241 = pneg %p61
      %p242 = pneg %p85
      %p243 = pneg %p82
      %p244 = pneg %p106
      %p245 = pneg %p103
      %p246 = pneg %p127
      %p247 = pneg %p124
      %p248 = pneg %p148
      %p249 = pneg %p145
      %p250 = pneg %p174
      %p251 = pneg %p171
      %p252 = scmp.lt.s32.totalorder %s17, 1
      %s253 = scalar_select %p252, %s17, 1
      %s254 = smul.addr %s253, 16
      %s255 = smul.addr %s254, 8
      %s256 = scalar_lea.vmem %s6, %s255
      %p257 = scmp.lt.s32.totalorder %s17, 1
      %s258 = scalar_select %p257, %s17, 1
      %s259 = smul.addr %s258, 16
      %s260 = smul.addr %s259, 8
      %s261 = scalar_lea.vmem %s0, %s260
      %p262 = scmp.lt.s32.totalorder %s17, 1
      %s263 = scalar_select %p262, %s17, 1
      %s264 = smul.addr %s263, 16
      %s265 = smul.addr %s264, 8
      %s266 = scalar_lea.vmem %s1, %s265
      %p267 = scmp.lt.s32.totalorder %s17, 1
      %s268 = scalar_select %p267, %s17, 1
      %s269 = smul.addr %s268, 16
      %s270 = smul.addr %s269, 8
      %s271 = scalar_lea.vmem %s6, %s270
      %v272 = vld [vmem:[%s261] sm:$0xff]
      %v273 = vld [vmem:[%s261 + $0x8] sm:$0xff]
      %v274 = vld [vmem:[%s261 + $0x10] sm:$0xff]
      %v275 = vld [vmem:[%s261 + $0x18] sm:$0xff]
      %v276 = vld [vmem:[%s261 + $0x20] sm:$0xff]
      %v277 = vld [vmem:[%s261 + $0x28] sm:$0xff]
      %v278 = vld [vmem:[%s261 + $0x30] sm:$0xff]
      %v279 = vld [vmem:[%s261 + $0x38] sm:$0xff]
      %v280 = vld [vmem:[%s261 + $0x40] sm:$0xff]
      %v281 = vld [vmem:[%s261 + $0x48] sm:$0xff]
      %v282 = vld [vmem:[%s261 + $0x50] sm:$0xff]
      %v283 = vld [vmem:[%s261 + $0x58] sm:$0xff]
      %v284 = vld [vmem:[%s261 + $0x60] sm:$0xff]
      %v285 = vld [vmem:[%s261 + $0x68] sm:$0xff]
      %v286 = vld [vmem:[%s261 + $0x70] sm:$0xff]
      %v287 = vld [vmem:[%s261 + $0x78] sm:$0xff]
      %288 = vadd.xlane.f32.xlu0 %v272
      %v289 = vpop.xlane.xlu0 %288
      %290 = vadd.xlane.f32.xlu0 %v273
      %v291 = vpop.xlane.xlu0 %290
      %292 = vadd.xlane.f32.xlu0 %v274
      %v293 = vpop.xlane.xlu0 %292
      %294 = vadd.xlane.f32.xlu0 %v275
      %v295 = vpop.xlane.xlu0 %294
      %296 = vadd.xlane.f32.xlu0 %v276
      %v297 = vpop.xlane.xlu0 %296
      %298 = vadd.xlane.f32.xlu0 %v277
      %v299 = vpop.xlane.xlu0 %298
      %300 = vadd.xlane.f32.xlu0 %v278
      %v301 = vpop.xlane.xlu0 %300
      %302 = vadd.xlane.f32.xlu0 %v279
      %v303 = vpop.xlane.xlu0 %302
      %304 = vadd.xlane.f32.xlu0 %v280
      %v305 = vpop.xlane.xlu0 %304
      %306 = vadd.xlane.f32.xlu0 %v281
      %v307 = vpop.xlane.xlu0 %306
      %308 = vadd.xlane.f32.xlu0 %v282
      %v309 = vpop.xlane.xlu0 %308
      %310 = vadd.xlane.f32.xlu0 %v283
      %v311 = vpop.xlane.xlu0 %310
      %312 = vadd.xlane.f32.xlu0 %v284
      %v313 = vpop.xlane.xlu0 %312
      %314 = vadd.xlane.f32.xlu0 %v285
      %v315 = vpop.xlane.xlu0 %314
      %316 = vadd.xlane.f32.xlu0 %v286
      %v317 = vpop.xlane.xlu0 %316
      %318 = vadd.xlane.f32.xlu0 %v287
      %v319 = vpop.xlane.xlu0 %318
      %v320 = vmax.f32 %v289, 1.0
      %v321 = vmax.f32 %v291, 1.0
      %v322 = vmax.f32 %v293, 1.0
      %v323 = vmax.f32 %v295, 1.0
      %v324 = vmax.f32 %v297, 1.0
      %v325 = vmax.f32 %v299, 1.0
      %v326 = vmax.f32 %v301, 1.0
      %v327 = vmax.f32 %v303, 1.0
      %v328 = vmax.f32 %v305, 1.0
      %v329 = vmax.f32 %v307, 1.0
      %v330 = vmax.f32 %v309, 1.0
      %v331 = vmax.f32 %v311, 1.0
      %v332 = vmax.f32 %v313, 1.0
      %v333 = vmax.f32 %v315, 1.0
      %v334 = vmax.f32 %v317, 1.0
      %v335 = vmax.f32 %v319, 1.0
      %v336 = vrsqrt.pop %v320
      %v337 = vrsqrt.pop %v321
      %v338 = vrsqrt.pop %v322
      %v339 = vrsqrt.pop %v323
      %v340 = vrsqrt.pop %v324
      %v341 = vrsqrt.pop %v325
      %v342 = vrsqrt.pop %v326
      %v343 = vrsqrt.pop %v327
      %v344 = vrsqrt.pop %v328
      %v345 = vrsqrt.pop %v329
      %v346 = vrsqrt.pop %v330
      %v347 = vrsqrt.pop %v331
      %v348 = vrsqrt.pop %v332
      %v349 = vrsqrt.pop %v333
      %v350 = vrsqrt.pop %v334
      %v351 = vrsqrt.pop %v335
      %v352 = vld [vmem:[%s266] sm:$0xff]
      %v353 = vld [vmem:[%s266 + $0x8] sm:$0xff]
      %v354 = vld [vmem:[%s266 + $0x10] sm:$0xff]
      %v355 = vld [vmem:[%s266 + $0x18] sm:$0xff]
      %v356 = vld [vmem:[%s266 + $0x20] sm:$0xff]
      %v357 = vld [vmem:[%s266 + $0x28] sm:$0xff]
      %v358 = vld [vmem:[%s266 + $0x30] sm:$0xff]
      %v359 = vld [vmem:[%s266 + $0x38] sm:$0xff]
      %v360 = vld [vmem:[%s266 + $0x40] sm:$0xff]
      %v361 = vld [vmem:[%s266 + $0x48] sm:$0xff]
      %v362 = vld [vmem:[%s266 + $0x50] sm:$0xff]
      %v363 = vld [vmem:[%s266 + $0x58] sm:$0xff]
      %v364 = vld [vmem:[%s266 + $0x60] sm:$0xff]
      %v365 = vld [vmem:[%s266 + $0x68] sm:$0xff]
      %v366 = vld [vmem:[%s266 + $0x70] sm:$0xff]
      %v367 = vld [vmem:[%s266 + $0x78] sm:$0xff]
      %v368 = vld [vmem:[%s5] sm:$0x7]
      %v369 = vmul.f32 %v336, %v352
      %v370 = vmul.f32 %v337, %v353
      %v371 = vmul.f32 %v338, %v354
      %v372 = vmul.f32 %v339, %v355
      %v373 = vmul.f32 %v340, %v356
      %v374 = vmul.f32 %v341, %v357
      %v375 = vmul.f32 %v342, %v358
      %v376 = vmul.f32 %v343, %v359
      %v377 = vmul.f32 %v344, %v360
      %v378 = vmul.f32 %v345, %v361
      %v379 = vmul.f32 %v346, %v362
      %v380 = vmul.f32 %v347, %v363
      %v381 = vmul.f32 %v348, %v364
      %v382 = vmul.f32 %v349, %v365
      %v383 = vmul.f32 %v350, %v366
      %v384 = vmul.f32 %v351, %v367
      %385 = vmatprep.subr.mxu0 0.0
      %386 = vmatpush1.msra.mxu0 %v369
      %387 = vmatprep.subr.mxu0 0.0
      %388 = vmatpush1.msra.mxu0 %v370
      %389 = vmatprep.subr.mxu0 0.0
      %390 = vmatpush1.msra.mxu0 %v371
      %391 = vmatprep.subr.mxu0 0.0
      %392 = vmatpush1.msra.mxu0 %v372
      %393 = vmatprep.subr.mxu0 0.0
      %394 = vmatpush1.msra.mxu0 %v373
      %395 = vmatprep.subr.mxu0 0.0
      %396 = vmatpush1.msra.mxu0 %v374
      %397 = vmatprep.subr.mxu0 0.0
      %398 = vmatpush1.msra.mxu0 %v375
      %399 = vmatprep.subr.mxu0 0.0
      %400 = vmatpush1.msra.mxu0 %v376
      %401 = vmatprep.subr.mxu0 0.0
      %402 = vmatpush1.msra.mxu0 %v377
      %403 = vmatprep.subr.mxu0 0.0
      %404 = vmatpush1.msra.mxu0 %v378
      %405 = vmatprep.subr.mxu0 0.0
      %406 = vmatpush1.msra.mxu0 %v379
      %407 = vmatprep.subr.mxu0 0.0
      %408 = vmatpush1.msra.mxu0 %v380
      %409 = vmatprep.subr.mxu0 0.0
      %410 = vmatpush1.msra.mxu0 %v381
      %411 = vmatprep.subr.mxu0 0.0
      %412 = vmatpush1.msra.mxu0 %v382
      %413 = vmatprep.subr.mxu0 0.0
      %414 = vmatpush1.msra.mxu0 %v383
      %415 = vmatprep.subr.mxu0 0.0
      %416 = vmatpush1.msra.mxu0 %v384
      %417 = vmatprep.subr.mxu0 0.0
      %418 = vmatpush1.msra.mxu0 0.0
      %419 = vmatprep.subr.mxu0 0.0
      %420 = vmatpush1.msra.mxu0 0.0
      %421 = vmatprep.subr.mxu0 0.0
      %422 = vmatpush1.msra.mxu0 0.0
      %423 = vmatprep.subr.mxu0 0.0
      %424 = vmatpush1.msra.mxu0 0.0
      %425 = vmatprep.subr.mxu0 0.0
      %426 = vmatpush1.msra.mxu0 0.0
      %427 = vmatprep.subr.mxu0 0.0
      %428 = vmatpush1.msra.mxu0 0.0
      %429 = vmatprep.subr.mxu0 0.0
      %430 = vmatpush1.msra.mxu0 0.0
      %431 = vmatprep.subr.mxu0 0.0
      %432 = vmatpush1.msra.mxu0 0.0
      %433 = vmatprep.subr.mxu0 0.0
      %434 = vmatpush1.msra.mxu0 0.0
      %435 = vmatprep.subr.mxu0 0.0
      %436 = vmatpush1.msra.mxu0 0.0
      %437 = vmatprep.subr.mxu0 0.0
      %438 = vmatpush1.msra.mxu0 0.0
      %439 = vmatprep.subr.mxu0 0.0
      %440 = vmatpush1.msra.mxu0 0.0
      %441 = vmatprep.subr.mxu0 0.0
      %442 = vmatpush1.msra.mxu0 0.0
      %443 = vmatprep.subr.mxu0 0.0
      %444 = vmatpush1.msra.mxu0 0.0
      %445 = vmatprep.subr.mxu0 0.0
      %446 = vmatpush1.msra.mxu0 0.0
      %447 = vmatprep.subr.mxu0 0.0
      %448 = vmatpush1.msra.mxu0 0.0
      %449 = vmatprep.mubr.f32.mxu0 0.0
      %450 = vmatmul.mubr.f32.gmra.mrb[0].mxu0 %v272
      %v451 = vpop.f32.mrb[0].mxu0
      %v452 = vadd.f32 0.0, %v451
      %v453 = vpop.f32.mrb[0].mxu0
      %454 = vmatprep.mubr.f32.mxu0 0.0
      %455 = vmatmul.mubr.f32.gmra.mrb[0].mxu0 %v273
      %v456 = vpop.f32.mrb[0].mxu0
      %v457 = vadd.f32 0.0, %v456
      %v458 = vpop.f32.mrb[0].mxu0
      %459 = vmatprep.mubr.f32.mxu0 0.0
      %460 = vmatmul.mubr.f32.gmra.mrb[0].mxu0 %v274
      %v461 = vpop.f32.mrb[0].mxu0
      %v462 = vadd.f32 0.0, %v461
      %v463 = vpop.f32.mrb[0].mxu0
      %464 = vmatprep.mubr.f32.mxu0 0.0
      %465 = vmatmul.mubr.f32.gmra.mrb[0].mxu0 %v275
      %v466 = vpop.f32.mrb[0].mxu0
      %v467 = vadd.f32 0.0, %v466
      %v468 = vpop.f32.mrb[0].mxu0
      %469 = vmatprep.mubr.f32.mxu0 0.0
      %470 = vmatmul.mubr.f32.gmra.mrb[0].mxu0 %v276
      %v471 = vpop.f32.mrb[0].mxu0
      %v472 = vadd.f32 0.0, %v471
      %v473 = vpop.f32.mrb[0].mxu0
      %474 = vmatprep.mubr.f32.mxu0 0.0
      %475 = vmatmul.mubr.f32.gmra.mrb[0].mxu0 %v277
      %v476 = vpop.f32.mrb[0].mxu0
      %v477 = vadd.f32 0.0, %v476
      %v478 = vpop.f32.mrb[0].mxu0
      %479 = vmatprep.mubr.f32.mxu0 0.0
      %480 = vmatmul.mubr.f32.gmra.mrb[0].mxu0 %v278
      %v481 = vpop.f32.mrb[0].mxu0
      %v482 = vadd.f32 0.0, %v481
      %v483 = vpop.f32.mrb[0].mxu0
      %484 = vmatprep.mubr.f32.mxu0 0.0
      %485 = vmatmul.mubr.f32.gmra.mrb[0].mxu0 %v279
      %v486 = vpop.f32.mrb[0].mxu0
      %v487 = vadd.f32 0.0, %v486
      %v488 = vpop.f32.mrb[0].mxu0
      %489 = vmatprep.mubr.f32.mxu0 0.0
      %490 = vmatmul.mubr.f32.gmra.mrb[0].mxu0 %v280
      %v491 = vpop.f32.mrb[0].mxu0
      %v492 = vadd.f32 0.0, %v491
      %v493 = vpop.f32.mrb[0].mxu0
      %494 = vmatprep.mubr.f32.mxu0 0.0
      %495 = vmatmul.mubr.f32.gmra.mrb[0].mxu0 %v281
      %v496 = vpop.f32.mrb[0].mxu0
      %v497 = vadd.f32 0.0, %v496
      %v498 = vpop.f32.mrb[0].mxu0
      %499 = vmatprep.mubr.f32.mxu0 0.0
      %500 = vmatmul.mubr.f32.gmra.mrb[0].mxu0 %v282
      %v501 = vpop.f32.mrb[0].mxu0
      %v502 = vadd.f32 0.0, %v501
      %v503 = vpop.f32.mrb[0].mxu0
      %504 = vmatprep.mubr.f32.mxu0 0.0
      %505 = vmatmul.mubr.f32.gmra.mrb[0].mxu0 %v283
      %v506 = vpop.f32.mrb[0].mxu0
      %v507 = vadd.f32 0.0, %v506
      %v508 = vpop.f32.mrb[0].mxu0
      %509 = vmatprep.mubr.f32.mxu0 0.0
      %510 = vmatmul.mubr.f32.gmra.mrb[0].mxu0 %v284
      %v511 = vpop.f32.mrb[0].mxu0
      %v512 = vadd.f32 0.0, %v511
      %v513 = vpop.f32.mrb[0].mxu0
      %514 = vmatprep.mubr.f32.mxu0 0.0
      %515 = vmatmul.mubr.f32.gmra.mrb[0].mxu0 %v285
      %v516 = vpop.f32.mrb[0].mxu0
      %v517 = vadd.f32 0.0, %v516
      %v518 = vpop.f32.mrb[0].mxu0
      %519 = vmatprep.mubr.f32.mxu0 0.0
      %520 = vmatmul.mubr.f32.gmra.mrb[0].mxu0 %v286
      %v521 = vpop.f32.mrb[0].mxu0
      %v522 = vadd.f32 0.0, %v521
      %v523 = vpop.f32.mrb[0].mxu0
      %524 = vmatprep.mubr.f32.mxu0 0.0
      %525 = vmatmul.mubr.f32.gmra.mrb[0].mxu0 %v287
      %v526 = vpop.f32.mrb[0].mxu0
      %v527 = vadd.f32 0.0, %v526
      %v528 = vpop.f32.mrb[0].mxu0
      %529 = vdwg.mxu0
      %v530 = vmul.f32 %v336, %v452
      %v531 = vmul.f32 %v337, %v457
      %v532 = vmul.f32 %v338, %v462
      %v533 = vmul.f32 %v339, %v467
      %v534 = vmul.f32 %v340, %v472
      %v535 = vmul.f32 %v341, %v477
      %v536 = vmul.f32 %v342, %v482
      %v537 = vmul.f32 %v343, %v487
      %v538 = vmul.f32 %v344, %v492
      %v539 = vmul.f32 %v345, %v497
      %v540 = vmul.f32 %v346, %v502
      %v541 = vmul.f32 %v347, %v507
      %v542 = vmul.f32 %v348, %v512
      %v543 = vmul.f32 %v349, %v517
      %v544 = vmul.f32 %v350, %v522
      %v545 = vmul.f32 %v351, %v527
      %v546 = vld [vmem:[%s2] sm:$0x1]
      %548 = vset.pattern.permute.xlu0 0
      %549 = vperm.xlu0 %548, %v530
      %v550 = vpop.permute.xlu0 %549
      %553 = vset.pattern.permute.xlu0 0
      %554 = vperm.xlu0 %553, %v531
      %v555 = vpop.permute.xlu0 %554
      %558 = vset.pattern.permute.xlu0 0
      %559 = vperm.xlu0 %558, %v532
      %v560 = vpop.permute.xlu0 %559
      %563 = vset.pattern.permute.xlu0 0
      %564 = vperm.xlu0 %563, %v533
      %v565 = vpop.permute.xlu0 %564
      %568 = vset.pattern.permute.xlu0 0
      %569 = vperm.xlu0 %568, %v534
      %v570 = vpop.permute.xlu0 %569
      %573 = vset.pattern.permute.xlu0 0
      %574 = vperm.xlu0 %573, %v535
      %v575 = vpop.permute.xlu0 %574
      %578 = vset.pattern.permute.xlu0 0
      %579 = vperm.xlu0 %578, %v536
      %v580 = vpop.permute.xlu0 %579
      %583 = vset.pattern.permute.xlu0 0
      %584 = vperm.xlu0 %583, %v537
      %v585 = vpop.permute.xlu0 %584
      %588 = vset.pattern.permute.xlu0 0
      %589 = vperm.xlu0 %588, %v538
      %v590 = vpop.permute.xlu0 %589
      %593 = vset.pattern.permute.xlu0 0
      %594 = vperm.xlu0 %593, %v539
      %v595 = vpop.permute.xlu0 %594
      %598 = vset.pattern.permute.xlu0 0
      %599 = vperm.xlu0 %598, %v540
      %v600 = vpop.permute.xlu0 %599
      %603 = vset.pattern.permute.xlu0 0
      %604 = vperm.xlu0 %603, %v541
      %v605 = vpop.permute.xlu0 %604
      %608 = vset.pattern.permute.xlu0 0
      %609 = vperm.xlu0 %608, %v542
      %v610 = vpop.permute.xlu0 %609
      %613 = vset.pattern.permute.xlu0 0
      %614 = vperm.xlu0 %613, %v543
      %v615 = vpop.permute.xlu0 %614
      %618 = vset.pattern.permute.xlu0 0
      %619 = vperm.xlu0 %618, %v544
      %v620 = vpop.permute.xlu0 %619
      %623 = vset.pattern.permute.xlu0 0
      %624 = vperm.xlu0 %623, %v545
      %v625 = vpop.permute.xlu0 %624
      %v628 = vlaneseq
      %v629 = vshrl.u32 %v628, 7
      %v630 = vsub.s32 0, %v629
      %v631 = vrot.slane %v546, %v630
      %v633 = vmul.f32 %v550, %v631
      %v634 = vmul.f32 %v555, %v631
      %v635 = vmul.f32 %v560, %v631
      %v636 = vmul.f32 %v565, %v631
      %v637 = vmul.f32 %v570, %v631
      %v638 = vmul.f32 %v575, %v631
      %v639 = vmul.f32 %v580, %v631
      %v640 = vmul.f32 %v585, %v631
      %v641 = vmul.f32 %v590, %v631
      %v642 = vmul.f32 %v595, %v631
      %v643 = vmul.f32 %v600, %v631
      %v644 = vmul.f32 %v605, %v631
      %v645 = vmul.f32 %v610, %v631
      %v646 = vmul.f32 %v615, %v631
      %v647 = vmul.f32 %v620, %v631
      %v648 = vmul.f32 %v625, %v631
      %v649 = vlaneseq
      %v650 = vshrl.u32 %v649, 7
      %v651 = vsub.s32 0, %v650
      %v652 = vrot.slane %v368, %v651
      %v653 = vadd.f32 %v633, %v652
      %v654 = vadd.f32 %v634, %v652
      %v655 = vadd.f32 %v635, %v652
      %v656 = vadd.f32 %v636, %v652
      %v657 = vadd.f32 %v637, %v652
      %v658 = vadd.f32 %v638, %v652
      %v659 = vadd.f32 %v639, %v652
      %v660 = vadd.f32 %v640, %v652
      %v661 = vadd.f32 %v641, %v652
      %v662 = vadd.f32 %v642, %v652
      %v663 = vadd.f32 %v643, %v652
      %v664 = vadd.f32 %v644, %v652
      %v665 = vadd.f32 %v645, %v652
      %v666 = vadd.f32 %v646, %v652
      %v667 = vadd.f32 %v647, %v652
      %v668 = vadd.f32 %v648, %v652
      %v669 = vmax.f32 %v653, 0.0
      %v670 = vmax.f32 %v654, 0.0
      %v671 = vmax.f32 %v655, 0.0
      %v672 = vmax.f32 %v656, 0.0
      %v673 = vmax.f32 %v657, 0.0
      %v674 = vmax.f32 %v658, 0.0
      %v675 = vmax.f32 %v659, 0.0
      %v676 = vmax.f32 %v660, 0.0
      %v677 = vmax.f32 %v661, 0.0
      %v678 = vmax.f32 %v662, 0.0
      %v679 = vmax.f32 %v663, 0.0
      %v680 = vmax.f32 %v664, 0.0
      %v681 = vmax.f32 %v665, 0.0
      %v682 = vmax.f32 %v666, 0.0
      %v683 = vmax.f32 %v667, 0.0
      %v684 = vmax.f32 %v668, 0.0
      %v685 = vld [vmem:[%s3] sm:$0xff]
      %v686 = vld [vmem:[%s3 + $0x8] sm:$0xff]
      %v687 = vld [vmem:[%s3 + $0x10] sm:$0xff]
      %v688 = vld [vmem:[%s3 + $0x18] sm:$0xff]
      %v689 = vld [vmem:[%s3 + $0x20] sm:$0xff]
      %v690 = vld [vmem:[%s3 + $0x28] sm:$0xff]
      %v691 = vld [vmem:[%s3 + $0x30] sm:$0xff]
      %v692 = vld [vmem:[%s3 + $0x38] sm:$0xff]
      %v693 = vld [vmem:[%s3 + $0x40] sm:$0xff]
      %v694 = vld [vmem:[%s3 + $0x48] sm:$0xff]
      %v695 = vld [vmem:[%s3 + $0x50] sm:$0xff]
      %v696 = vld [vmem:[%s3 + $0x58] sm:$0xff]
      %v697 = vld [vmem:[%s3 + $0x60] sm:$0xff]
      %v698 = vld [vmem:[%s3 + $0x68] sm:$0xff]
      %v699 = vld [vmem:[%s3 + $0x70] sm:$0xff]
      %v700 = vld [vmem:[%s3 + $0x78] sm:$0xff]
      %701 = vmatprep.subr.mxu0 0.0
      %702 = vmatpush1.msra.mxu0 %v685
      %703 = vmatprep.subr.mxu0 0.0
      %704 = vmatpush1.msra.mxu0 %v686
      %705 = vmatprep.subr.mxu0 0.0
      %706 = vmatpush1.msra.mxu0 %v687
      %707 = vmatprep.subr.mxu0 0.0
      %708 = vmatpush1.msra.mxu0 %v688
      %709 = vmatprep.subr.mxu0 0.0
      %710 = vmatpush1.msra.mxu0 %v689
      %711 = vmatprep.subr.mxu0 0.0
      %712 = vmatpush1.msra.mxu0 %v690
      %713 = vmatprep.subr.mxu0 0.0
      %714 = vmatpush1.msra.mxu0 %v691
      %715 = vmatprep.subr.mxu0 0.0
      %716 = vmatpush1.msra.mxu0 %v692
      %717 = vmatprep.subr.mxu0 0.0
      %718 = vmatpush1.msra.mxu0 %v693
      %719 = vmatprep.subr.mxu0 0.0
      %720 = vmatpush1.msra.mxu0 %v694
      %721 = vmatprep.subr.mxu0 0.0
      %722 = vmatpush1.msra.mxu0 %v695
      %723 = vmatprep.subr.mxu0 0.0
      %724 = vmatpush1.msra.mxu0 %v696
      %725 = vmatprep.subr.mxu0 0.0
      %726 = vmatpush1.msra.mxu0 %v697
      %727 = vmatprep.subr.mxu0 0.0
      %728 = vmatpush1.msra.mxu0 %v698
      %729 = vmatprep.subr.mxu0 0.0
      %730 = vmatpush1.msra.mxu0 %v699
      %731 = vmatprep.subr.mxu0 0.0
      %732 = vmatpush1.msra.mxu0 %v700
      %733 = vmatprep.subr.mxu0 0.0
      %734 = vmatpush1.msra.mxu0 0.0
      %735 = vmatprep.subr.mxu0 0.0
      %736 = vmatpush1.msra.mxu0 0.0
      %737 = vmatprep.subr.mxu0 0.0
      %738 = vmatpush1.msra.mxu0 0.0
      %739 = vmatprep.subr.mxu0 0.0
      %740 = vmatpush1.msra.mxu0 0.0
      %741 = vmatprep.subr.mxu0 0.0
      %742 = vmatpush1.msra.mxu0 0.0
      %743 = vmatprep.subr.mxu0 0.0
      %744 = vmatpush1.msra.mxu0 0.0
      %745 = vmatprep.subr.mxu0 0.0
      %746 = vmatpush1.msra.mxu0 0.0
      %747 = vmatprep.subr.mxu0 0.0
      %748 = vmatpush1.msra.mxu0 0.0
      %749 = vmatprep.subr.mxu0 0.0
      %750 = vmatpush1.msra.mxu0 0.0
      %751 = vmatprep.subr.mxu0 0.0
      %752 = vmatpush1.msra.mxu0 0.0
      %753 = vmatprep.subr.mxu0 0.0
      %754 = vmatpush1.msra.mxu0 0.0
      %755 = vmatprep.subr.mxu0 0.0
      %756 = vmatpush1.msra.mxu0 0.0
      %757 = vmatprep.subr.mxu0 0.0
      %758 = vmatpush1.msra.mxu0 0.0
      %759 = vmatprep.subr.mxu0 0.0
      %760 = vmatpush1.msra.mxu0 0.0
      %761 = vmatprep.subr.mxu0 0.0
      %762 = vmatpush1.msra.mxu0 0.0
      %763 = vmatprep.subr.mxu0 0.0
      %764 = vmatpush1.msra.mxu0 0.0
      %765 = vmatprep.mubr.f32.mxu0 0.0
      %766 = vmatmul.mubr.f32.gmra.mrb[0].mxu0 %v669
      %v767 = vpop.f32.mrb[0].mxu0
      %v768 = vadd.f32 0.0, %v767
      %v769 = vpop.f32.mrb[0].mxu0
      %770 = vmatprep.mubr.f32.mxu0 0.0
      %771 = vmatmul.mubr.f32.gmra.mrb[0].mxu0 %v670
      %v772 = vpop.f32.mrb[0].mxu0
      %v773 = vadd.f32 0.0, %v772
      %v774 = vpop.f32.mrb[0].mxu0
      %775 = vmatprep.mubr.f32.mxu0 0.0
      %776 = vmatmul.mubr.f32.gmra.mrb[0].mxu0 %v671
      %v777 = vpop.f32.mrb[0].mxu0
      %v778 = vadd.f32 0.0, %v777
      %v779 = vpop.f32.mrb[0].mxu0
      %780 = vmatprep.mubr.f32.mxu0 0.0
      %781 = vmatmul.mubr.f32.gmra.mrb[0].mxu0 %v672
      %v782 = vpop.f32.mrb[0].mxu0
      %v783 = vadd.f32 0.0, %v782
      %v784 = vpop.f32.mrb[0].mxu0
      %785 = vmatprep.mubr.f32.mxu0 0.0
      %786 = vmatmul.mubr.f32.gmra.mrb[0].mxu0 %v673
      %v787 = vpop.f32.mrb[0].mxu0
      %v788 = vadd.f32 0.0, %v787
      %v789 = vpop.f32.mrb[0].mxu0
      %790 = vmatprep.mubr.f32.mxu0 0.0
      %791 = vmatmul.mubr.f32.gmra.mrb[0].mxu0 %v674
      %v792 = vpop.f32.mrb[0].mxu0
      %v793 = vadd.f32 0.0, %v792
      %v794 = vpop.f32.mrb[0].mxu0
      %795 = vmatprep.mubr.f32.mxu0 0.0
      %796 = vmatmul.mubr.f32.gmra.mrb[0].mxu0 %v675
      %v797 = vpop.f32.mrb[0].mxu0
      %v798 = vadd.f32 0.0, %v797
      %v799 = vpop.f32.mrb[0].mxu0
      %800 = vmatprep.mubr.f32.mxu0 0.0
      %801 = vmatmul.mubr.f32.gmra.mrb[0].mxu0 %v676
      %v802 = vpop.f32.mrb[0].mxu0
      %v803 = vadd.f32 0.0, %v802
      %v804 = vpop.f32.mrb[0].mxu0
      %805 = vmatprep.mubr.f32.mxu0 0.0
      %806 = vmatmul.mubr.f32.gmra.mrb[0].mxu0 %v677
      %v807 = vpop.f32.mrb[0].mxu0
      %v808 = vadd.f32 0.0, %v807
      %v809 = vpop.f32.mrb[0].mxu0
      %810 = vmatprep.mubr.f32.mxu0 0.0
      %811 = vmatmul.mubr.f32.gmra.mrb[0].mxu0 %v678
      %v812 = vpop.f32.mrb[0].mxu0
      %v813 = vadd.f32 0.0, %v812
      %v814 = vpop.f32.mrb[0].mxu0
      %815 = vmatprep.mubr.f32.mxu0 0.0
      %816 = vmatmul.mubr.f32.gmra.mrb[0].mxu0 %v679
      %v817 = vpop.f32.mrb[0].mxu0
      %v818 = vadd.f32 0.0, %v817
      %v819 = vpop.f32.mrb[0].mxu0
      %820 = vmatprep.mubr.f32.mxu0 0.0
      %821 = vmatmul.mubr.f32.gmra.mrb[0].mxu0 %v680
      %v822 = vpop.f32.mrb[0].mxu0
      %v823 = vadd.f32 0.0, %v822
      %v824 = vpop.f32.mrb[0].mxu0
      %825 = vmatprep.mubr.f32.mxu0 0.0
      %826 = vmatmul.mubr.f32.gmra.mrb[0].mxu0 %v681
      %v827 = vpop.f32.mrb[0].mxu0
      %v828 = vadd.f32 0.0, %v827
      %v829 = vpop.f32.mrb[0].mxu0
      %830 = vmatprep.mubr.f32.mxu0 0.0
      %831 = vmatmul.mubr.f32.gmra.mrb[0].mxu0 %v682
      %v832 = vpop.f32.mrb[0].mxu0
      %v833 = vadd.f32 0.0, %v832
      %v834 = vpop.f32.mrb[0].mxu0
      %835 = vmatprep.mubr.f32.mxu0 0.0
      %836 = vmatmul.mubr.f32.gmra.mrb[0].mxu0 %v683
      %v837 = vpop.f32.mrb[0].mxu0
      %v838 = vadd.f32 0.0, %v837
      %v839 = vpop.f32.mrb[0].mxu0
      %840 = vmatprep.mubr.f32.mxu0 0.0
      %841 = vmatmul.mubr.f32.gmra.mrb[0].mxu0 %v684
      %v842 = vpop.f32.mrb[0].mxu0
      %v843 = vadd.f32 0.0, %v842
      %v844 = vpop.f32.mrb[0].mxu0
      %845 = vdwg.mxu0
      %v846 = vmul.f32 %v336, %v768
      %v847 = vmul.f32 %v337, %v773
      %v848 = vmul.f32 %v338, %v778
      %v849 = vmul.f32 %v339, %v783
      %v850 = vmul.f32 %v340, %v788
      %v851 = vmul.f32 %v341, %v793
      %v852 = vmul.f32 %v342, %v798
      %v853 = vmul.f32 %v343, %v803
      %v854 = vmul.f32 %v344, %v808
      %v855 = vmul.f32 %v345, %v813
      %v856 = vmul.f32 %v346, %v818
      %v857 = vmul.f32 %v347, %v823
      %v858 = vmul.f32 %v348, %v828
      %v859 = vmul.f32 %v349, %v833
      %v860 = vmul.f32 %v350, %v838
      %v861 = vmul.f32 %v351, %v843
      %862 = vmatprep.subr.mxu0 0.0
      %863 = vmatpush1.msra.mxu0 %v846
      %864 = vmatprep.subr.mxu0 0.0
      %865 = vmatpush1.msra.mxu0 %v847
      %866 = vmatprep.subr.mxu0 0.0
      %867 = vmatpush1.msra.mxu0 %v848
      %868 = vmatprep.subr.mxu0 0.0
      %869 = vmatpush1.msra.mxu0 %v849
      %870 = vmatprep.subr.mxu0 0.0
      %871 = vmatpush1.msra.mxu0 %v850
      %872 = vmatprep.subr.mxu0 0.0
      %873 = vmatpush1.msra.mxu0 %v851
      %874 = vmatprep.subr.mxu0 0.0
      %875 = vmatpush1.msra.mxu0 %v852
      %876 = vmatprep.subr.mxu0 0.0
      %877 = vmatpush1.msra.mxu0 %v853
      %878 = vmatprep.subr.mxu0 0.0
      %879 = vmatpush1.msra.mxu0 %v854
      %880 = vmatprep.subr.mxu0 0.0
      %881 = vmatpush1.msra.mxu0 %v855
      %882 = vmatprep.subr.mxu0 0.0
      %883 = vmatpush1.msra.mxu0 %v856
      %884 = vmatprep.subr.mxu0 0.0
      %885 = vmatpush1.msra.mxu0 %v857
      %886 = vmatprep.subr.mxu0 0.0
      %887 = vmatpush1.msra.mxu0 %v858
      %888 = vmatprep.subr.mxu0 0.0
      %889 = vmatpush1.msra.mxu0 %v859
      %890 = vmatprep.subr.mxu0 0.0
      %891 = vmatpush1.msra.mxu0 %v860
      %892 = vmatprep.subr.mxu0 0.0
      %893 = vmatpush1.msra.mxu0 %v861
      %894 = vmatprep.subr.mxu0 0.0
      %895 = vmatpush1.msra.mxu0 0.0
      %896 = vmatprep.subr.mxu0 0.0
      %897 = vmatpush1.msra.mxu0 0.0
      %898 = vmatprep.subr.mxu0 0.0
      %899 = vmatpush1.msra.mxu0 0.0
      %900 = vmatprep.subr.mxu0 0.0
      %901 = vmatpush1.msra.mxu0 0.0
      %902 = vmatprep.subr.mxu0 0.0
      %903 = vmatpush1.msra.mxu0 0.0
      %904 = vmatprep.subr.mxu0 0.0
      %905 = vmatpush1.msra.mxu0 0.0
      %906 = vmatprep.subr.mxu0 0.0
      %907 = vmatpush1.msra.mxu0 0.0
      %908 = vmatprep.subr.mxu0 0.0
      %909 = vmatpush1.msra.mxu0 0.0
      %910 = vmatprep.subr.mxu0 0.0
      %911 = vmatpush1.msra.mxu0 0.0
      %912 = vmatprep.subr.mxu0 0.0
      %913 = vmatpush1.msra.mxu0 0.0
      %914 = vmatprep.subr.mxu0 0.0
      %915 = vmatpush1.msra.mxu0 0.0
      %916 = vmatprep.subr.mxu0 0.0
      %917 = vmatpush1.msra.mxu0 0.0
      %918 = vmatprep.subr.mxu0 0.0
      %919 = vmatpush1.msra.mxu0 0.0
      %920 = vmatprep.subr.mxu0 0.0
      %921 = vmatpush1.msra.mxu0 0.0
      %922 = vmatprep.subr.mxu0 0.0
      %923 = vmatpush1.msra.mxu0 0.0
      %924 = vmatprep.subr.mxu0 0.0
      %925 = vmatpush1.msra.mxu0 0.0
      %926 = vmatprep.mubr.f32.mxu0 0.0
      %927 = vmatmul.mubr.f32.gmra.mrb[0].mxu0 %v272
      %v928 = vpop.f32.mrb[0].mxu0
      %v929 = vadd.f32 0.0, %v928
      %v930 = vpop.f32.mrb[0].mxu0
      %931 = vmatprep.mubr.f32.mxu0 0.0
      %932 = vmatmul.mubr.f32.gmra.mrb[0].mxu0 %v273
      %v933 = vpop.f32.mrb[0].mxu0
      %v934 = vadd.f32 0.0, %v933
      %v935 = vpop.f32.mrb[0].mxu0
      %936 = vmatprep.mubr.f32.mxu0 0.0
      %937 = vmatmul.mubr.f32.gmra.mrb[0].mxu0 %v274
      %v938 = vpop.f32.mrb[0].mxu0
      %v939 = vadd.f32 0.0, %v938
      %v940 = vpop.f32.mrb[0].mxu0
      %941 = vmatprep.mubr.f32.mxu0 0.0
      %942 = vmatmul.mubr.f32.gmra.mrb[0].mxu0 %v275
      %v943 = vpop.f32.mrb[0].mxu0
      %v944 = vadd.f32 0.0, %v943
      %v945 = vpop.f32.mrb[0].mxu0
      %946 = vmatprep.mubr.f32.mxu0 0.0
      %947 = vmatmul.mubr.f32.gmra.mrb[0].mxu0 %v276
      %v948 = vpop.f32.mrb[0].mxu0
      %v949 = vadd.f32 0.0, %v948
      %v950 = vpop.f32.mrb[0].mxu0
      %951 = vmatprep.mubr.f32.mxu0 0.0
      %952 = vmatmul.mubr.f32.gmra.mrb[0].mxu0 %v277
      %v953 = vpop.f32.mrb[0].mxu0
      %v954 = vadd.f32 0.0, %v953
      %v955 = vpop.f32.mrb[0].mxu0
      %956 = vmatprep.mubr.f32.mxu0 0.0
      %957 = vmatmul.mubr.f32.gmra.mrb[0].mxu0 %v278
      %v958 = vpop.f32.mrb[0].mxu0
      %v959 = vadd.f32 0.0, %v958
      %v960 = vpop.f32.mrb[0].mxu0
      %961 = vmatprep.mubr.f32.mxu0 0.0
      %962 = vmatmul.mubr.f32.gmra.mrb[0].mxu0 %v279
      %v963 = vpop.f32.mrb[0].mxu0
      %v964 = vadd.f32 0.0, %v963
      %v965 = vpop.f32.mrb[0].mxu0
      %966 = vmatprep.mubr.f32.mxu0 0.0
      %967 = vmatmul.mubr.f32.gmra.mrb[0].mxu0 %v280
      %v968 = vpop.f32.mrb[0].mxu0
      %v969 = vadd.f32 0.0, %v968
      %v970 = vpop.f32.mrb[0].mxu0
      %971 = vmatprep.mubr.f32.mxu0 0.0
      %972 = vmatmul.mubr.f32.gmra.mrb[0].mxu0 %v281
      %v973 = vpop.f32.mrb[0].mxu0
      %v974 = vadd.f32 0.0, %v973
      %v975 = vpop.f32.mrb[0].mxu0
      %976 = vmatprep.mubr.f32.mxu0 0.0
      %977 = vmatmul.mubr.f32.gmra.mrb[0].mxu0 %v282
      %v978 = vpop.f32.mrb[0].mxu0
      %v979 = vadd.f32 0.0, %v978
      %v980 = vpop.f32.mrb[0].mxu0
      %981 = vmatprep.mubr.f32.mxu0 0.0
      %982 = vmatmul.mubr.f32.gmra.mrb[0].mxu0 %v283
      %v983 = vpop.f32.mrb[0].mxu0
      %v984 = vadd.f32 0.0, %v983
      %v985 = vpop.f32.mrb[0].mxu0
      %986 = vmatprep.mubr.f32.mxu0 0.0
      %987 = vmatmul.mubr.f32.gmra.mrb[0].mxu0 %v284
      %v988 = vpop.f32.mrb[0].mxu0
      %v989 = vadd.f32 0.0, %v988
      %v990 = vpop.f32.mrb[0].mxu0
      %991 = vmatprep.mubr.f32.mxu0 0.0
      %992 = vmatmul.mubr.f32.gmra.mrb[0].mxu0 %v285
      %v993 = vpop.f32.mrb[0].mxu0
      %v994 = vadd.f32 0.0, %v993
      %v995 = vpop.f32.mrb[0].mxu0
      %996 = vmatprep.mubr.f32.mxu0 0.0
      %997 = vmatmul.mubr.f32.gmra.mrb[0].mxu0 %v286
      %v998 = vpop.f32.mrb[0].mxu0
      %v999 = vadd.f32 0.0, %v998
      %v1000 = vpop.f32.mrb[0].mxu0
      %1001 = vmatprep.mubr.f32.mxu0 0.0
      %1002 = vmatmul.mubr.f32.gmra.mrb[0].mxu0 %v287
      %v1003 = vpop.f32.mrb[0].mxu0
      %v1004 = vadd.f32 0.0, %v1003
      %v1005 = vpop.f32.mrb[0].mxu0
      %1006 = vdwg.mxu0
      %v1007 = vmul.f32 %v336, %v929
      %v1008 = vmul.f32 %v337, %v934
      %v1009 = vmul.f32 %v338, %v939
      %v1010 = vmul.f32 %v339, %v944
      %v1011 = vmul.f32 %v340, %v949
      %v1012 = vmul.f32 %v341, %v954
      %v1013 = vmul.f32 %v342, %v959
      %v1014 = vmul.f32 %v343, %v964
      %v1015 = vmul.f32 %v344, %v969
      %v1016 = vmul.f32 %v345, %v974
      %v1017 = vmul.f32 %v346, %v979
      %v1018 = vmul.f32 %v347, %v984
      %v1019 = vmul.f32 %v348, %v989
      %v1020 = vmul.f32 %v349, %v994
      %v1021 = vmul.f32 %v350, %v999
      %v1022 = vmul.f32 %v351, %v1004
      %v1023 = vlaneseq
      %v1024 = vshrl.u32 %v1023, 7
      %v1025 = vsub.s32 1, %v1024
      %v1026 = vrot.slane %v368, %v1025
      %v1027 = vadd.f32 %v1007, %v1026
      %v1028 = vadd.f32 %v1008, %v1026
      %v1029 = vadd.f32 %v1009, %v1026
      %v1030 = vadd.f32 %v1010, %v1026
      %v1031 = vadd.f32 %v1011, %v1026
      %v1032 = vadd.f32 %v1012, %v1026
      %v1033 = vadd.f32 %v1013, %v1026
      %v1034 = vadd.f32 %v1014, %v1026
      %v1035 = vadd.f32 %v1015, %v1026
      %v1036 = vadd.f32 %v1016, %v1026
      %v1037 = vadd.f32 %v1017, %v1026
      %v1038 = vadd.f32 %v1018, %v1026
      %v1039 = vadd.f32 %v1019, %v1026
      %v1040 = vadd.f32 %v1020, %v1026
      %v1041 = vadd.f32 %v1021, %v1026
      %v1042 = vadd.f32 %v1022, %v1026
      %v1043 = vmax.f32 %v1027, 0.0
      %v1044 = vmax.f32 %v1028, 0.0
      %v1045 = vmax.f32 %v1029, 0.0
      %v1046 = vmax.f32 %v1030, 0.0
      %v1047 = vmax.f32 %v1031, 0.0
      %v1048 = vmax.f32 %v1032, 0.0
      %v1049 = vmax.f32 %v1033, 0.0
      %v1050 = vmax.f32 %v1034, 0.0
      %v1051 = vmax.f32 %v1035, 0.0
      %v1052 = vmax.f32 %v1036, 0.0
      %v1053 = vmax.f32 %v1037, 0.0
      %v1054 = vmax.f32 %v1038, 0.0
      %v1055 = vmax.f32 %v1039, 0.0
      %v1056 = vmax.f32 %v1040, 0.0
      %v1057 = vmax.f32 %v1041, 0.0
      %v1058 = vmax.f32 %v1042, 0.0
      %v1059 = vld [vmem:[%s4] sm:$0xff]
      %v1060 = vld [vmem:[%s4 + $0x8] sm:$0xff]
      %v1061 = vld [vmem:[%s4 + $0x10] sm:$0xff]
      %v1062 = vld [vmem:[%s4 + $0x18] sm:$0xff]
      %v1063 = vld [vmem:[%s4 + $0x20] sm:$0xff]
      %v1064 = vld [vmem:[%s4 + $0x28] sm:$0xff]
      %v1065 = vld [vmem:[%s4 + $0x30] sm:$0xff]
      %v1066 = vld [vmem:[%s4 + $0x38] sm:$0xff]
      %v1067 = vld [vmem:[%s4 + $0x40] sm:$0xff]
      %v1068 = vld [vmem:[%s4 + $0x48] sm:$0xff]
      %v1069 = vld [vmem:[%s4 + $0x50] sm:$0xff]
      %v1070 = vld [vmem:[%s4 + $0x58] sm:$0xff]
      %v1071 = vld [vmem:[%s4 + $0x60] sm:$0xff]
      %v1072 = vld [vmem:[%s4 + $0x68] sm:$0xff]
      %v1073 = vld [vmem:[%s4 + $0x70] sm:$0xff]
      %v1074 = vld [vmem:[%s4 + $0x78] sm:$0xff]
      %v1075 = vlaneseq
      %v1076 = vshrl.u32 %v1075, 7
      %v1077 = vsub.s32 2, %v1076
      %v1078 = vrot.slane %v368, %v1077
      %1079 = vmatprep.subr.mxu0 0.0
      %1080 = vmatpush1.msra.mxu0 %v1059
      %1081 = vmatprep.subr.mxu0 0.0
      %1082 = vmatpush1.msra.mxu0 %v1060
      %1083 = vmatprep.subr.mxu0 0.0
      %1084 = vmatpush1.msra.mxu0 %v1061
      %1085 = vmatprep.subr.mxu0 0.0
      %1086 = vmatpush1.msra.mxu0 %v1062
      %1087 = vmatprep.subr.mxu0 0.0
      %1088 = vmatpush1.msra.mxu0 %v1063
      %1089 = vmatprep.subr.mxu0 0.0
      %1090 = vmatpush1.msra.mxu0 %v1064
      %1091 = vmatprep.subr.mxu0 0.0
      %1092 = vmatpush1.msra.mxu0 %v1065
      %1093 = vmatprep.subr.mxu0 0.0
      %1094 = vmatpush1.msra.mxu0 %v1066
      %1095 = vmatprep.subr.mxu0 0.0
      %1096 = vmatpush1.msra.mxu0 %v1067
      %1097 = vmatprep.subr.mxu0 0.0
      %1098 = vmatpush1.msra.mxu0 %v1068
      %1099 = vmatprep.subr.mxu0 0.0
      %1100 = vmatpush1.msra.mxu0 %v1069
      %1101 = vmatprep.subr.mxu0 0.0
      %1102 = vmatpush1.msra.mxu0 %v1070
      %1103 = vmatprep.subr.mxu0 0.0
      %1104 = vmatpush1.msra.mxu0 %v1071
      %1105 = vmatprep.subr.mxu0 0.0
      %1106 = vmatpush1.msra.mxu0 %v1072
      %1107 = vmatprep.subr.mxu0 0.0
      %1108 = vmatpush1.msra.mxu0 %v1073
      %1109 = vmatprep.subr.mxu0 0.0
      %1110 = vmatpush1.msra.mxu0 %v1074
      %1111 = vmatprep.subr.mxu0 0.0
      %1112 = vmatpush1.msra.mxu0 0.0
      %1113 = vmatprep.subr.mxu0 0.0
      %1114 = vmatpush1.msra.mxu0 0.0
      %1115 = vmatprep.subr.mxu0 0.0
      %1116 = vmatpush1.msra.mxu0 0.0
      %1117 = vmatprep.subr.mxu0 0.0
      %1118 = vmatpush1.msra.mxu0 0.0
      %1119 = vmatprep.subr.mxu0 0.0
      %1120 = vmatpush1.msra.mxu0 0.0
      %1121 = vmatprep.subr.mxu0 0.0
      %1122 = vmatpush1.msra.mxu0 0.0
      %1123 = vmatprep.subr.mxu0 0.0
      %1124 = vmatpush1.msra.mxu0 0.0
      %1125 = vmatprep.subr.mxu0 0.0
      %1126 = vmatpush1.msra.mxu0 0.0
      %1127 = vmatprep.subr.mxu0 0.0
      %1128 = vmatpush1.msra.mxu0 0.0
      %1129 = vmatprep.subr.mxu0 0.0
      %1130 = vmatpush1.msra.mxu0 0.0
      %1131 = vmatprep.subr.mxu0 0.0
      %1132 = vmatpush1.msra.mxu0 0.0
      %1133 = vmatprep.subr.mxu0 0.0
      %1134 = vmatpush1.msra.mxu0 0.0
      %1135 = vmatprep.subr.mxu0 0.0
      %1136 = vmatpush1.msra.mxu0 0.0
      %1137 = vmatprep.subr.mxu0 0.0
      %1138 = vmatpush1.msra.mxu0 0.0
      %1139 = vmatprep.subr.mxu0 0.0
      %1140 = vmatpush1.msra.mxu0 0.0
      %1141 = vmatprep.subr.mxu0 0.0
      %1142 = vmatpush1.msra.mxu0 0.0
      %1143 = vmatprep.mubr.f32.mxu0 0.0
      %1144 = vmatmul.mubr.f32.gmra.mrb[0].mxu0 %v1043
      %v1145 = vpop.f32.mrb[0].mxu0
      %v1146 = vadd.f32 %v1078, %v1145
      %v1147 = vpop.f32.mrb[0].mxu0
      %1148 = vmatprep.mubr.f32.mxu0 0.0
      %1149 = vmatmul.mubr.f32.gmra.mrb[0].mxu0 %v1044
      %v1150 = vpop.f32.mrb[0].mxu0
      %v1151 = vadd.f32 %v1078, %v1150
      %v1152 = vpop.f32.mrb[0].mxu0
      %1153 = vmatprep.mubr.f32.mxu0 0.0
      %1154 = vmatmul.mubr.f32.gmra.mrb[0].mxu0 %v1045
      %v1155 = vpop.f32.mrb[0].mxu0
      %v1156 = vadd.f32 %v1078, %v1155
      %v1157 = vpop.f32.mrb[0].mxu0
      %1158 = vmatprep.mubr.f32.mxu0 0.0
      %1159 = vmatmul.mubr.f32.gmra.mrb[0].mxu0 %v1046
      %v1160 = vpop.f32.mrb[0].mxu0
      %v1161 = vadd.f32 %v1078, %v1160
      %v1162 = vpop.f32.mrb[0].mxu0
      %1163 = vmatprep.mubr.f32.mxu0 0.0
      %1164 = vmatmul.mubr.f32.gmra.mrb[0].mxu0 %v1047
      %v1165 = vpop.f32.mrb[0].mxu0
      %v1166 = vadd.f32 %v1078, %v1165
      %v1167 = vpop.f32.mrb[0].mxu0
      %1168 = vmatprep.mubr.f32.mxu0 0.0
      %1169 = vmatmul.mubr.f32.gmra.mrb[0].mxu0 %v1048
      %v1170 = vpop.f32.mrb[0].mxu0
      %v1171 = vadd.f32 %v1078, %v1170
      %v1172 = vpop.f32.mrb[0].mxu0
      %1173 = vmatprep.mubr.f32.mxu0 0.0
      %1174 = vmatmul.mubr.f32.gmra.mrb[0].mxu0 %v1049
      %v1175 = vpop.f32.mrb[0].mxu0
      %v1176 = vadd.f32 %v1078, %v1175
      %v1177 = vpop.f32.mrb[0].mxu0
      %1178 = vmatprep.mubr.f32.mxu0 0.0
      %1179 = vmatmul.mubr.f32.gmra.mrb[0].mxu0 %v1050
      %v1180 = vpop.f32.mrb[0].mxu0
      %v1181 = vadd.f32 %v1078, %v1180
      %v1182 = vpop.f32.mrb[0].mxu0
      %1183 = vmatprep.mubr.f32.mxu0 0.0
      %1184 = vmatmul.mubr.f32.gmra.mrb[0].mxu0 %v1051
      %v1185 = vpop.f32.mrb[0].mxu0
      %v1186 = vadd.f32 %v1078, %v1185
      %v1187 = vpop.f32.mrb[0].mxu0
      %1188 = vmatprep.mubr.f32.mxu0 0.0
      %1189 = vmatmul.mubr.f32.gmra.mrb[0].mxu0 %v1052
      %v1190 = vpop.f32.mrb[0].mxu0
      %v1191 = vadd.f32 %v1078, %v1190
      %v1192 = vpop.f32.mrb[0].mxu0
      %1193 = vmatprep.mubr.f32.mxu0 0.0
      %1194 = vmatmul.mubr.f32.gmra.mrb[0].mxu0 %v1053
      %v1195 = vpop.f32.mrb[0].mxu0
      %v1196 = vadd.f32 %v1078, %v1195
      %v1197 = vpop.f32.mrb[0].mxu0
      %1198 = vmatprep.mubr.f32.mxu0 0.0
      %1199 = vmatmul.mubr.f32.gmra.mrb[0].mxu0 %v1054
      %v1200 = vpop.f32.mrb[0].mxu0
      %v1201 = vadd.f32 %v1078, %v1200
      %v1202 = vpop.f32.mrb[0].mxu0
      %1203 = vmatprep.mubr.f32.mxu0 0.0
      %1204 = vmatmul.mubr.f32.gmra.mrb[0].mxu0 %v1055
      %v1205 = vpop.f32.mrb[0].mxu0
      %v1206 = vadd.f32 %v1078, %v1205
      %v1207 = vpop.f32.mrb[0].mxu0
      %1208 = vmatprep.mubr.f32.mxu0 0.0
      %1209 = vmatmul.mubr.f32.gmra.mrb[0].mxu0 %v1056
      %v1210 = vpop.f32.mrb[0].mxu0
      %v1211 = vadd.f32 %v1078, %v1210
      %v1212 = vpop.f32.mrb[0].mxu0
      %1213 = vmatprep.mubr.f32.mxu0 0.0
      %1214 = vmatmul.mubr.f32.gmra.mrb[0].mxu0 %v1057
      %v1215 = vpop.f32.mrb[0].mxu0
      %v1216 = vadd.f32 %v1078, %v1215
      %v1217 = vpop.f32.mrb[0].mxu0
      %1218 = vmatprep.mubr.f32.mxu0 0.0
      %1219 = vmatmul.mubr.f32.gmra.mrb[0].mxu0 %v1058
      %v1220 = vpop.f32.mrb[0].mxu0
      %v1221 = vadd.f32 %v1078, %v1220
      %v1222 = vpop.f32.mrb[0].mxu0
      %1223 = vdwg.mxu0
      %1224 = vst [vmem:[%s271] sm:$0xff] %v1146
      %1225 = vst [vmem:[%s271 + $0x8] sm:$0xff] %v1151
      %1226 = vst [vmem:[%s271 + $0x10] sm:$0xff] %v1156
      %1227 = vst [vmem:[%s271 + $0x18] sm:$0xff] %v1161
      %1228 = vst [vmem:[%s271 + $0x20] sm:$0xff] %v1166
      %1229 = vst [vmem:[%s271 + $0x28] sm:$0xff] %v1171
      %1230 = vst [vmem:[%s271 + $0x30] sm:$0xff] %v1176
      %1231 = vst [vmem:[%s271 + $0x38] sm:$0xff] %v1181
      %1232 = vst [vmem:[%s271 + $0x40] sm:$0xff] %v1186
      %1233 = vst [vmem:[%s271 + $0x48] sm:$0xff] %v1191
      %1234 = vst [vmem:[%s271 + $0x50] sm:$0xff] %v1196
      %1235 = vst [vmem:[%s271 + $0x58] sm:$0xff] %v1201
      %1236 = vst [vmem:[%s271 + $0x60] sm:$0xff] %v1206
      %1237 = vst [vmem:[%s271 + $0x68] sm:$0xff] %v1211
      %1238 = vst [vmem:[%s271 + $0x70] sm:$0xff] %v1216
      %1239 = vst [vmem:[%s271 + $0x78] sm:$0xff] %v1221
      %p1240 = scmp.lt.s32.totalorder %s17, 1
      %s1241 = scalar_select %p1240, %s17, 1
      %s1242 = smul.addr %s1241, 16
      %s1243 = smul.addr %s1242, 8
      %s1244 = scalar_lea.vmem %s6, %s1243
      // Predicated region
      $region45: #{correlation_gnn_pallas.1} parent=43 // pred_check
        %p1245 = pneg %p171
      $region46: #{correlation_gnn_pallas.1} parent=43 // pred_check_branch
        %1247 = sbr.rel (%p1245) target = $region48
      $region47: #{correlation_gnn_pallas.1} parent=43 // pred_region
        _
      $region48: #{correlation_gnn_pallas.1} parent=43 // pred_fallthru
        _
    $region44: #{correlation_gnn_pallas.1} parent=5 // pred_fallthru
      _
    %p1248 = scmp.le.s32.totalorder 2, %s12
    // Predicated region
    $region49: #{correlation_gnn_pallas.1} parent=5 // pred_check
      %p1249 = pneg %p1248
    $region50: #{correlation_gnn_pallas.1} parent=5 // pred_check_branch
      %1251 = sbr.rel (%p1249) target = $region52
    $region51: #{correlation_gnn_pallas.1} parent=5 // pred_region
      %s1252 = ssub.s32 %s12, 2
      // Predicated region
      $region53: #{correlation_gnn_pallas.1} parent=51 // pred_check
        %p1253 = pneg %p177
      $region54: #{correlation_gnn_pallas.1} parent=51 // pred_check_branch
        %1255 = sbr.rel (%p1253) target = $region56
      $region55: #{correlation_gnn_pallas.1} parent=51 // pred_region
        %p1256 = scmp.lt.s32.totalorder %s18, 1
        %s1257 = scalar_select %p1256, %s18, 1
        %s1258 = smul.addr %s1257, 16
        %s1259 = smul.addr %s1258, 8
        %s1260 = scalar_lea.vmem %s6, %s1259
      $region56: #{correlation_gnn_pallas.1} parent=51 // pred_fallthru
        _
    $region52: #{correlation_gnn_pallas.1} parent=5 // pred_fallthru
      _
  $region6: #{correlation_gnn_pallas.1} parent=0 // loop_footer
    %s16 = sadd.s32 1, %s12
  $region7: #{correlation_gnn_pallas.1} parent=0 // loop_footer_branch
    %11 = sbr.rel target = $region3
  $region8: #{correlation_gnn_pallas.1} parent=0 // loop_exit
    _

</llo_original>
